<compile_context>
chip_gen: v7x
topology: tpu7x:2x2x1
jax: 0.10.0
libtpu: 0.0.40
codegen_flags: <defaults>
</compile_context>

<pallas_src>
import jax
import jax.numpy as jnp
from jax.experimental import pallas as pl
from jax.experimental.pallas import tpu as pltpu


def make_adding_rnn_kernel(T, B_pad, B_real, decays):
    """Builds the fused forward kernel.

    decays: tuple of T Python floats (getdecay(i) for NVAR='1n'), folded into
    the fully-unrolled recurrence as constants (no per-step scalar loads).
    decays[T-1] is pre-folded into wlin on the host, so the final step keeps
    the raw tanh activation.
    """

    def kernel(x_ref, wih_ref, whh_ref, b_ref, wlin_ref, blin_ref, y_ref,
               out_ref, loss_ref):
        # Hoisted input projection: one MXU call covering all T steps,
        # off the serial critical path.  pre: [T*Bp, Hp] f32.
        pre = (jnp.dot(x_ref[...], wih_ref[...],
                       preferred_element_type=jnp.float32)
               + b_ref[...])

        # Whh held once in registers as bf16 for the whole unrolled loop.
        whh_bf = whh_ref[...].astype(jnp.bfloat16)            # [Hp, Hp]

        if T == 1:
            # Degenerate single-step sequence: no recurrence matmul at all.
            tanh_T = jnp.tanh(pre[0:B_pad, :])
        else:
            # Step 0: h starts at zeros -> skip the zero h@Whh MXU pass.
            h = decays[0] * jnp.tanh(pre[0:B_pad, :])          # f32 [Bp, Hp]

            # Steps 1..T-2: fully unrolled so the LLO scheduler can overlap
            # MXU/EUP latency across steps.  bf16 MXU inputs, f32 accumulate.
            for i in range(1, T - 1):
                pre_i = pre[i * B_pad:(i + 1) * B_pad, :]      # static slice
                h = decays[i] * jnp.tanh(
                    pre_i + jnp.dot(h.astype(jnp.bfloat16), whh_bf,
                                    preferred_element_type=jnp.float32))

            # Final step: decays[T-1] is folded into wlin (host side), so we
            # only need the raw tanh activation here.
            pre_T = pre[(T - 1) * B_pad:T * B_pad, :]
            tanh_T = jnp.tanh(
                pre_T + jnp.dot(h.astype(jnp.bfloat16), whh_bf,
                                preferred_element_type=jnp.float32))

        # Head: lane-dense [1, Hp] wlin row (pre-scaled by decays[T-1]);
        # VPU multiply + XLU lane reduce instead of an N=1 MXU matmul.
        out_vec = (jnp.sum(tanh_T * wlin_ref[...], axis=-1, keepdims=True)
                   + blin_ref[...])                            # [Bp, 1]

        # Lane-dense output store (avoid masked vst on a width-1 output);
        # the host slices [:, :1].
        out_ref[...] = jnp.broadcast_to(out_vec, (B_pad, out_ref.shape[1]))

        # loss = MSELoss(out, y), mean over the real batch rows only.
        diff = out_vec - y_ref[...]
        if B_real != B_pad:
            row = jax.lax.broadcasted_iota(jnp.int32, (B_pad, 1), 0)
            diff = jnp.where(row < B_real, diff, 0.0)
        loss_ref[0, 0] = jnp.sum(diff * diff) / float(B_real)

    return kernel


def adding_model_forward(x, y, params):
    """x: [T, B, I] float32 (seq-major), y: [B, 1] float32 target."""
    T, B, I = x.shape
    H = params["whh"].shape[0]
    Hp = ((H + 127) // 128) * 128        # pad hidden (lane) dim to 128
    Bp = ((B + 7) // 8) * 8              # pad batch to a whole sublane tile

    # Zero-pad weights / bias so all lanes are dense.  Padded hidden lanes
    # stay exactly 0 through tanh/decay (tanh(0)=0), so semantics unchanged.
    wih = jnp.pad(params["wih"], ((0, 0), (0, Hp - H)))
    whh = jnp.pad(params["whh"], ((0, Hp - H), (0, Hp - H)))
    b = jnp.pad(params["b"], ((0, 0), (0, Hp - H)))
    blin = params["blin"]

    # getdecay(i) with NVAR == '1n': 1 - 1/(i+2), baked in as constants.
    decays = tuple(float(1.0 - 1.0 / (i + 2)) for i in range(T))

    # Head weight stored lane-dense as [1, Hp], with the last decay folded in.
    wlin_row = jnp.pad(params["wlin"].reshape(1, H) * decays[T - 1],
                       ((0, 0), (0, Hp - H)))

    # Pad the batch (zeros); padded rows are masked out of the loss in-kernel.
    if Bp != B:
        x = jnp.pad(x, ((0, 0), (0, Bp - B), (0, 0)))
        y = jnp.pad(y, ((0, Bp - B), (0, 0)))

    x2d = x.reshape(T * Bp, I)           # free reshape on the XLA side

    cost = pl.CostEstimate(
        flops=2 * T * Bp * I * Hp + 2 * max(T - 1, 0) * Bp * Hp * Hp
              + 2 * Bp * Hp,
        transcendentals=T * Bp * Hp,
        bytes_accessed=4 * (T * Bp * I + I * Hp + Hp * Hp + 2 * Hp
                            + 2 * Bp + Bp * 128 + 2),
    )

    out_pad, loss = pl.pallas_call(
        make_adding_rnn_kernel(T, Bp, B, decays),
        out_shape=(
            jax.ShapeDtypeStruct((Bp, 128), jnp.float32),  # lane-dense out
            jax.ShapeDtypeStruct((1, 1), jnp.float32),     # MSE loss (scalar)
        ),
        in_specs=[
            pl.BlockSpec(memory_space=pltpu.VMEM),         # x2d      [T*Bp, I]
            pl.BlockSpec(memory_space=pltpu.VMEM),         # Wih      [I, Hp]
            pl.BlockSpec(memory_space=pltpu.VMEM),         # Whh      [Hp, Hp]
            pl.BlockSpec(memory_space=pltpu.VMEM),         # b        [1, Hp]
            pl.BlockSpec(memory_space=pltpu.VMEM),         # wlin row [1, Hp]
            pl.BlockSpec(memory_space=pltpu.VMEM),         # blin     [1, 1]
            pl.BlockSpec(memory_space=pltpu.VMEM),         # y        [Bp, 1]
        ],
        out_specs=(
            pl.BlockSpec(memory_space=pltpu.VMEM),         # out (lane-dense)
            pl.BlockSpec(memory_space=pltpu.SMEM),         # loss
        ),
        cost_estimate=cost,
    )(x2d, wih, whh, b, wlin_row, blin, y)

    out = out_pad[:B, :1]
    loss = loss[0, 0]

    # TODO(synk): accuracy bookkeeping (argmax over a size-1 head vs integer
    # labels, gated on args.c_length) is degenerate for this head; left as glue.
    accuracy = jnp.float32(0.0)
    return loss, accuracy, out


def init_params(key, input_size, hidden_size):
    k1, k2, k3 = jax.random.split(key, 3)
    # Simple RNN cell params (rec_net), stored as (in, out).
    wih = jax.random.normal(k1, (input_size, hidden_size), jnp.float32) * 0.1
    whh = jax.random.normal(k2, (hidden_size, hidden_size), jnp.float32) * 0.1
    b = jnp.zeros((1, hidden_size), jnp.float32)
    # nn.Linear(hidden_size, 1) with xavier_normal_ init on the weight.
    xavier_std = (2.0 / (hidden_size + 1)) ** 0.5
    wlin = jax.random.normal(k3, (hidden_size, 1), jnp.float32) * xavier_std
    blin = jnp.zeros((1, 1), jnp.float32)
    return {"wih": wih, "whh": whh, "b": b, "wlin": wlin, "blin": blin}


if __name__ == "__main__":
    # seq=8, batch=8, input=2 (adding problem), hidden=32
    T, B, I, H = 8, 8, 2, 32

    key = jax.random.PRNGKey(0)
    kx, ky, kp = jax.random.split(key, 3)
    x = jax.random.normal(kx, (T, B, I), jnp.float32)
    y = jax.random.normal(ky, (B, 1), jnp.float32)
    params = init_params(kp, I, H)

    loss, accuracy, out = adding_model_forward(x, y, params)
    jax.block_until_ready((loss, accuracy, out))
    print("KERNEL_OK")
</pallas_src>

<mosaic_0001>
module attributes {stable_mosaic.version = 11 : i64} {
  func.func @kernel(%arg0: memref<64x2xf32, #tpu.memory_space<vmem>>, %arg1: memref<2x128xf32, #tpu.memory_space<vmem>>, %arg2: memref<128x128xf32, #tpu.memory_space<vmem>>, %arg3: memref<1x128xf32, #tpu.memory_space<vmem>>, %arg4: memref<1x128xf32, #tpu.memory_space<vmem>>, %arg5: memref<1x1xf32, #tpu.memory_space<vmem>>, %arg6: memref<8x1xf32, #tpu.memory_space<vmem>>, %arg7: memref<8x128xf32, #tpu.memory_space<vmem>>, %arg8: memref<1x1xf32, #tpu.memory_space<smem>>) attributes {dimension_semantics = [], scalar_prefetch = 0 : i64, scratch_operands = 0 : i64, tpu.core_type = #tpu.core_type<tc>} {
    %c0 = arith.constant 0 : index
    %c0_0 = arith.constant 0 : index
    %0 = vector.load %arg0[%c0, %c0_0] : memref<64x2xf32, #tpu.memory_space<vmem>>, vector<64x2xf32>
    %c0_1 = arith.constant 0 : index
    %c0_2 = arith.constant 0 : index
    %1 = vector.load %arg1[%c0_1, %c0_2] : memref<2x128xf32, #tpu.memory_space<vmem>>, vector<2x128xf32>
    %cst = arith.constant dense<0.000000e+00> : vector<64x128xf32>
    %2 = tpu.matmul %0, %1, %cst {dimension_numbers = #tpu.dot_dimension_numbers<[1], [0], [0], [1], [0, 0, 1, 1], [], []>} : vector<64x2xf32>, vector<2x128xf32>, vector<64x128xf32> -> vector<64x128xf32>
    %c0_3 = arith.constant 0 : index
    %c0_4 = arith.constant 0 : index
    %3 = vector.load %arg3[%c0_3, %c0_4] : memref<1x128xf32, #tpu.memory_space<vmem>>, vector<1x128xf32>
    %4 = vector.broadcast %3 : vector<1x128xf32> to vector<64x128xf32>
    %5 = arith.addf %2, %4 : vector<64x128xf32>
    %c0_5 = arith.constant 0 : index
    %c0_6 = arith.constant 0 : index
    %6 = vector.load %arg2[%c0_5, %c0_6] : memref<128x128xf32, #tpu.memory_space<vmem>>, vector<128x128xf32>
    %7 = arith.truncf %6 : vector<128x128xf32> to vector<128x128xbf16>
    %8 = vector.extract_strided_slice %5 {offsets = [0, 0], sizes = [8, 128], strides = [1, 1]} : vector<64x128xf32> to vector<8x128xf32>
    %9 = math.tanh %8 : vector<8x128xf32>
    %cst_7 = arith.constant 5.000000e-01 : f32
    %10 = vector.broadcast %cst_7 : f32 to vector<8x128xf32>
    %11 = arith.mulf %10, %9 : vector<8x128xf32>
    %12 = vector.extract_strided_slice %5 {offsets = [8, 0], sizes = [8, 128], strides = [1, 1]} : vector<64x128xf32> to vector<8x128xf32>
    %13 = arith.truncf %11 : vector<8x128xf32> to vector<8x128xbf16>
    %cst_8 = arith.constant dense<0.000000e+00> : vector<8x128xf32>
    %14 = tpu.matmul %13, %7, %cst_8 {dimension_numbers = #tpu.dot_dimension_numbers<[1], [0], [0], [1], [0, 0, 1, 1], [], []>} : vector<8x128xbf16>, vector<128x128xbf16>, vector<8x128xf32> -> vector<8x128xf32>
    %15 = arith.addf %12, %14 : vector<8x128xf32>
    %16 = math.tanh %15 : vector<8x128xf32>
    %cst_9 = arith.constant 0.666666686 : f32
    %17 = vector.broadcast %cst_9 : f32 to vector<8x128xf32>
    %18 = arith.mulf %17, %16 : vector<8x128xf32>
    %19 = vector.extract_strided_slice %5 {offsets = [16, 0], sizes = [8, 128], strides = [1, 1]} : vector<64x128xf32> to vector<8x128xf32>
    %20 = arith.truncf %18 : vector<8x128xf32> to vector<8x128xbf16>
    %cst_10 = arith.constant dense<0.000000e+00> : vector<8x128xf32>
    %21 = tpu.matmul %20, %7, %cst_10 {dimension_numbers = #tpu.dot_dimension_numbers<[1], [0], [0], [1], [0, 0, 1, 1], [], []>} : vector<8x128xbf16>, vector<128x128xbf16>, vector<8x128xf32> -> vector<8x128xf32>
    %22 = arith.addf %19, %21 : vector<8x128xf32>
    %23 = math.tanh %22 : vector<8x128xf32>
    %cst_11 = arith.constant 7.500000e-01 : f32
    %24 = vector.broadcast %cst_11 : f32 to vector<8x128xf32>
    %25 = arith.mulf %24, %23 : vector<8x128xf32>
    %26 = vector.extract_strided_slice %5 {offsets = [24, 0], sizes = [8, 128], strides = [1, 1]} : vector<64x128xf32> to vector<8x128xf32>
    %27 = arith.truncf %25 : vector<8x128xf32> to vector<8x128xbf16>
    %cst_12 = arith.constant dense<0.000000e+00> : vector<8x128xf32>
    %28 = tpu.matmul %27, %7, %cst_12 {dimension_numbers = #tpu.dot_dimension_numbers<[1], [0], [0], [1], [0, 0, 1, 1], [], []>} : vector<8x128xbf16>, vector<128x128xbf16>, vector<8x128xf32> -> vector<8x128xf32>
    %29 = arith.addf %26, %28 : vector<8x128xf32>
    %30 = math.tanh %29 : vector<8x128xf32>
    %cst_13 = arith.constant 8.000000e-01 : f32
    %31 = vector.broadcast %cst_13 : f32 to vector<8x128xf32>
    %32 = arith.mulf %31, %30 : vector<8x128xf32>
    %33 = vector.extract_strided_slice %5 {offsets = [32, 0], sizes = [8, 128], strides = [1, 1]} : vector<64x128xf32> to vector<8x128xf32>
    %34 = arith.truncf %32 : vector<8x128xf32> to vector<8x128xbf16>
    %cst_14 = arith.constant dense<0.000000e+00> : vector<8x128xf32>
    %35 = tpu.matmul %34, %7, %cst_14 {dimension_numbers = #tpu.dot_dimension_numbers<[1], [0], [0], [1], [0, 0, 1, 1], [], []>} : vector<8x128xbf16>, vector<128x128xbf16>, vector<8x128xf32> -> vector<8x128xf32>
    %36 = arith.addf %33, %35 : vector<8x128xf32>
    %37 = math.tanh %36 : vector<8x128xf32>
    %cst_15 = arith.constant 0.833333313 : f32
    %38 = vector.broadcast %cst_15 : f32 to vector<8x128xf32>
    %39 = arith.mulf %38, %37 : vector<8x128xf32>
    %40 = vector.extract_strided_slice %5 {offsets = [40, 0], sizes = [8, 128], strides = [1, 1]} : vector<64x128xf32> to vector<8x128xf32>
    %41 = arith.truncf %39 : vector<8x128xf32> to vector<8x128xbf16>
    %cst_16 = arith.constant dense<0.000000e+00> : vector<8x128xf32>
    %42 = tpu.matmul %41, %7, %cst_16 {dimension_numbers = #tpu.dot_dimension_numbers<[1], [0], [0], [1], [0, 0, 1, 1], [], []>} : vector<8x128xbf16>, vector<128x128xbf16>, vector<8x128xf32> -> vector<8x128xf32>
    %43 = arith.addf %40, %42 : vector<8x128xf32>
    %44 = math.tanh %43 : vector<8x128xf32>
    %cst_17 = arith.constant 0.857142865 : f32
    %45 = vector.broadcast %cst_17 : f32 to vector<8x128xf32>
    %46 = arith.mulf %45, %44 : vector<8x128xf32>
    %47 = vector.extract_strided_slice %5 {offsets = [48, 0], sizes = [8, 128], strides = [1, 1]} : vector<64x128xf32> to vector<8x128xf32>
    %48 = arith.truncf %46 : vector<8x128xf32> to vector<8x128xbf16>
    %cst_18 = arith.constant dense<0.000000e+00> : vector<8x128xf32>
    %49 = tpu.matmul %48, %7, %cst_18 {dimension_numbers = #tpu.dot_dimension_numbers<[1], [0], [0], [1], [0, 0, 1, 1], [], []>} : vector<8x128xbf16>, vector<128x128xbf16>, vector<8x128xf32> -> vector<8x128xf32>
    %50 = arith.addf %47, %49 : vector<8x128xf32>
    %51 = math.tanh %50 : vector<8x128xf32>
    %cst_19 = arith.constant 8.750000e-01 : f32
    %52 = vector.broadcast %cst_19 : f32 to vector<8x128xf32>
    %53 = arith.mulf %52, %51 : vector<8x128xf32>
    %54 = vector.extract_strided_slice %5 {offsets = [56, 0], sizes = [8, 128], strides = [1, 1]} : vector<64x128xf32> to vector<8x128xf32>
    %55 = arith.truncf %53 : vector<8x128xf32> to vector<8x128xbf16>
    %cst_20 = arith.constant dense<0.000000e+00> : vector<8x128xf32>
    %56 = tpu.matmul %55, %7, %cst_20 {dimension_numbers = #tpu.dot_dimension_numbers<[1], [0], [0], [1], [0, 0, 1, 1], [], []>} : vector<8x128xbf16>, vector<128x128xbf16>, vector<8x128xf32> -> vector<8x128xf32>
    %57 = arith.addf %54, %56 : vector<8x128xf32>
    %58 = math.tanh %57 : vector<8x128xf32>
    %c0_21 = arith.constant 0 : index
    %c0_22 = arith.constant 0 : index
    %59 = vector.load %arg4[%c0_21, %c0_22] : memref<1x128xf32, #tpu.memory_space<vmem>>, vector<1x128xf32>
    %60 = vector.broadcast %59 : vector<1x128xf32> to vector<8x128xf32>
    %61 = arith.mulf %58, %60 : vector<8x128xf32>
    %cst_23 = arith.constant dense<0.000000e+00> : vector<8xf32>
    %62 = vector.multi_reduction <add>, %61, %cst_23 [1] : vector<8x128xf32> to vector<8xf32>
    %63 = vector.shape_cast %62 : vector<8xf32> to vector<8x1xf32>
    %c0_24 = arith.constant 0 : index
    %c0_25 = arith.constant 0 : index
    %64 = vector.load %arg5[%c0_24, %c0_25] : memref<1x1xf32, #tpu.memory_space<vmem>>, vector<1x1xf32>
    %65 = vector.broadcast %64 : vector<1x1xf32> to vector<8x1xf32>
    %66 = arith.addf %63, %65 : vector<8x1xf32>
    %67 = vector.shape_cast %66 : vector<8x1xf32> to vector<8x1xf32>
    %68 = vector.broadcast %67 : vector<8x1xf32> to vector<8x128xf32>
    %c0_26 = arith.constant 0 : index
    %c0_27 = arith.constant 0 : index
    %69 = vector.load %arg7[%c0_26, %c0_27] : memref<8x128xf32, #tpu.memory_space<vmem>>, vector<8x128xf32>
    tpu.vector_store %arg7[%c0_26, %c0_27], %68 {strides = array<i32>} : memref<8x128xf32, #tpu.memory_space<vmem>>, vector<8x128xf32>,
    %c0_28 = arith.constant 0 : index
    %c0_29 = arith.constant 0 : index
    %70 = vector.load %arg6[%c0_28, %c0_29] : memref<8x1xf32, #tpu.memory_space<vmem>>, vector<8x1xf32>
    %71 = arith.subf %66, %70 : vector<8x1xf32>
    %72 = arith.mulf %71, %71 : vector<8x1xf32>
    %73 = vector.shape_cast %72 : vector<8x1xf32> to vector<1x8x1xf32>
    %cst_30 = arith.constant dense<0.000000e+00> : vector<1xf32>
    %74 = vector.multi_reduction <add>, %73, %cst_30 [1, 2] : vector<1x8x1xf32> to vector<1xf32>
    %75 = vector.shape_cast %74 : vector<1xf32> to vector<1x1x1xf32>
    %76 = vector.extract %75[0, 0, 0] : f32 from vector<1x1x1xf32>
    %cst_31 = arith.constant 8.000000e+00 : f32
    %77 = arith.divf %76, %cst_31 : f32
    %c0_32 = arith.constant 0 : index
    %c0_33 = arith.constant 0 : index
    %78 = memref.load %arg8[%c0_32, %c0_33] : memref<1x1xf32, #tpu.memory_space<smem>>
    memref.store %77, %arg8[%c0_32, %c0_33] : memref<1x1xf32, #tpu.memory_space<smem>>
    return
  }
}

</mosaic_0001>

<llo_original>
// kernel: tpu_custom_call.1
$region0: #{tpu_custom_call.1}
  #allocation0 [shape = 'u32[]', space=smem, size = 0x4, offset = 0x4, fixed_abs, tag = 'smem constant byte address 0x4 - core index']
  #allocation1 [shape = 'u32[144,128]{1,0:T(1,128)}', space=vmem, size = 0x12000, scoped, tag = 'internal scratch']
  #allocation2 [shape = 'f32[1,1]{1,0:T(1,128)S(1)}', space=vmem, size = 0x200, scoped, tag = 'scoped memory for tpu_custom_call.1']
  %s0 = inlined_call_operand.vmem [shape: f32[64,2], index: 0, kind: input, shape index: {}]
  %s1 = inlined_call_operand.vmem [shape: f32[2,128], index: 1, kind: input, shape index: {}]
  %s2 = inlined_call_operand.hbm [shape: f32[128,128], index: 2, kind: input, shape index: {}]
  %s3 = inlined_call_operand.vmem [shape: f32[1,128], index: 3, kind: input, shape index: {}]
  %s4 = inlined_call_operand.vmem [shape: f32[1,128], index: 4, kind: input, shape index: {}]
  %s5 = inlined_call_operand.<no memory space> [shape: f32[1,1], index: 5, kind: input, shape index: {}]
  %s6 = inlined_call_operand.vmem [shape: f32[8,1], index: 6, kind: input, shape index: {}]
  %s7 = inlined_call_operand.hbm [shape: f32[8,128], index: 7, kind: output, shape index: {0}]
  %s8 = inlined_call_operand.hbm [shape: f32[1,1], index: 8, kind: output, shape index: {1}]
  %9 = xla_tuple %s7, %s8
  %s10 = sld [smem:[#allocation0]]
  $region50: #{tpu_custom_call.1} parent=0
    _
  %s12 = ssub.s32 1, %s10
  %s13 = scalar_select 0, %s12, %s10
  %v14 = vstv %s5
  %15 = vst [vmem:[#allocation2] sm:$0x1] %v14
  $region1: #{tpu_custom_call.1} parent=0
    #allocation3 [shape = 'u8[65536]{0}', space=vmem, size = 0x10000, scoped, tag = 'input window, operand 2, single buffered']
    #allocation4 [shape = 's32[1]{0}', space=sflag, size = 0x4, scoped, tag = 'scoped memory for tpu_custom_call.1']
    #allocation5 [shape = 's32[1]{0}', space=sflag, size = 0x4, scoped, tag = 'scoped memory for tpu_custom_call.1']
    #allocation6 [shape = 's32[1]{0}', space=sflag, size = 0x4, scoped, tag = 'scoped memory for tpu_custom_call.1']
    #allocation7 [shape = 'u8[4096]{0}', space=vmem, size = 0x1000, scoped, tag = 'output window, operand 0, single buffered']
    #allocation8 [shape = 'u8[512]{0}', space=smem, size = 0x200, scoped, tag = 'output window, operand 1, single buffered']
    %16 = vsyncpa [#allocation4], 0
    %17 = vsyncpa [#allocation5], 0
    %18 = vsyncpa [#allocation6], 0
    // Predicated region
    $region2: #{tpu_custom_call.1} parent=1 // pred_check
      _
    $region3: #{tpu_custom_call.1} parent=1 // pred_check_branch
      %20 = sbr.rel (0) target = $region5
    $region4: #{tpu_custom_call.1} parent=1 // pred_region
      _
    $region5: #{tpu_custom_call.1} parent=1 // pred_fallthru
      _
    // Predicated region
    $region6: #{tpu_custom_call.1} parent=1 // pred_check
      _
    $region7: #{tpu_custom_call.1} parent=1 // pred_check_branch
      %22 = sbr.rel (0) target = $region9
    $region8: #{tpu_custom_call.1} parent=1 // pred_region
      _
    $region9: #{tpu_custom_call.1} parent=1 // pred_fallthru
      _
    // Predicated region
    $region10: #{tpu_custom_call.1} parent=1 // pred_check
      _
    $region11: #{tpu_custom_call.1} parent=1 // pred_check_branch
      %24 = sbr.rel (0) target = $region13
    $region12: #{tpu_custom_call.1} parent=1 // pred_region
      %s26 = ssub.s32 2048, 2048
      %27 = vsyncadd [#allocation4], %s26
      %s28 = sshll.u32 [#allocation3], 4
      %s29 = int_to_ptr.vmem [resolvable:$true] %s28
      %34 = dma.hbm_to_vmem [thread:$0]  %s2, 2048, %s29, [#allocation4], 128, 128, 8
    $region13: #{tpu_custom_call.1} parent=1 // pred_fallthru
      _
    // Predicated region
    $region14: #{tpu_custom_call.1} parent=1 // pred_check
      _
    $region15: #{tpu_custom_call.1} parent=1 // pred_check_branch
      %36 = sbr.rel (0) target = $region17
    $region16: #{tpu_custom_call.1} parent=1 // pred_region
      _
    $region17: #{tpu_custom_call.1} parent=1 // pred_fallthru
      _
    // Predicated region
    $region18: #{tpu_custom_call.1} parent=1 // pred_check
      _
    $region19: #{tpu_custom_call.1} parent=1 // pred_check_branch
      %38 = sbr.rel (0) target = $region21
    $region20: #{tpu_custom_call.1} parent=1 // pred_region
      _
    $region21: #{tpu_custom_call.1} parent=1 // pred_fallthru
      _
    // Predicated region
    $region22: #{tpu_custom_call.1} parent=1 // pred_check
      _
    $region23: #{tpu_custom_call.1} parent=1 // pred_check_branch
      %40 = sbr.rel (0) target = $region25
    $region24: #{tpu_custom_call.1} parent=1 // pred_region
      _
    $region25: #{tpu_custom_call.1} parent=1 // pred_fallthru
      _
    // Predicated region
    $region26: #{tpu_custom_call.1} parent=1 // pred_check
      _
    $region27: #{tpu_custom_call.1} parent=1 // pred_check_branch
      %42 = sbr.rel (0) target = $region29
    $region28: #{tpu_custom_call.1} parent=1 // pred_region
      _
    $region29: #{tpu_custom_call.1} parent=1 // pred_fallthru
      _
    // Predicated region
    $region30: #{tpu_custom_call.1} parent=1 // pred_check
      _
    $region31: #{tpu_custom_call.1} parent=1 // pred_check_branch
      %44 = sbr.rel (0) target = $region33
    $region32: #{tpu_custom_call.1} parent=1 // pred_region
      %45 = dma.done [#allocation4], 2048
    $region33: #{tpu_custom_call.1} parent=1 // pred_fallthru
      _
    %v47 = vld [vmem:[%s0] sm:$0xff]
    %v48 = vld [vmem:[%s0 + $0x8] sm:$0xff]
    %v49 = vld [vmem:[%s0 + $0x10] sm:$0xff]
    %v50 = vld [vmem:[%s0 + $0x18] sm:$0xff]
    %v51 = vld [vmem:[%s0 + $0x20] sm:$0xff]
    %v52 = vld [vmem:[%s0 + $0x28] sm:$0xff]
    %v53 = vld [vmem:[%s0 + $0x30] sm:$0xff]
    %v54 = vld [vmem:[%s0 + $0x38] sm:$0xff]
    %v55 = vld [vmem:[%s1] sm:$0x3]
    %v56 = vld [vmem:[%s3] sm:$0x1]
    %v58 = vlaneseq
    %v59 = vshrl.u32 %v58, 7
    %v60 = vsub.s32 0, %v59
    %v61 = vrot.slane %v56, %v60
    %vm63 = vcmask 15360
    %v65 = vsel %vm63, %v47, 0
    %v68 = vsel %vm63, %v48, 0
    %v71 = vsel %vm63, %v49, 0
    %v74 = vsel %vm63, %v50, 0
    %v77 = vsel %vm63, %v51, 0
    %v80 = vsel %vm63, %v52, 0
    %v83 = vsel %vm63, %v53, 0
    %v86 = vsel %vm63, %v54, 0
    %vm88 = vcmask 1041408
    %v90 = vsel %vm88, %v55, 0
    %92 = vmatprep.subr.mxu0 0.0
    %93 = vmatpush1.msra.mxu0 %v90
    %94 = vmatprep.subr.mxu0 0.0
    %95 = vmatpush1.msra.mxu0 0.0
    %96 = vmatprep.subr.mxu0 0.0
    %97 = vmatpush1.msra.mxu0 0.0
    %98 = vmatprep.subr.mxu0 0.0
    %99 = vmatpush1.msra.mxu0 0.0
    %100 = vmatprep.subr.mxu0 0.0
    %101 = vmatpush1.msra.mxu0 0.0
    %102 = vmatprep.subr.mxu0 0.0
    %103 = vmatpush1.msra.mxu0 0.0
    %104 = vmatprep.subr.mxu0 0.0
    %105 = vmatpush1.msra.mxu0 0.0
    %106 = vmatprep.subr.mxu0 0.0
    %107 = vmatpush1.msra.mxu0 0.0
    %108 = vmatprep.subr.mxu0 0.0
    %109 = vmatpush1.msra.mxu0 0.0
    %110 = vmatprep.subr.mxu0 0.0
    %111 = vmatpush1.msra.mxu0 0.0
    %112 = vmatprep.subr.mxu0 0.0
    %113 = vmatpush1.msra.mxu0 0.0
    %114 = vmatprep.subr.mxu0 0.0
    %115 = vmatpush1.msra.mxu0 0.0
    %116 = vmatprep.subr.mxu0 0.0
    %117 = vmatpush1.msra.mxu0 0.0
    %118 = vmatprep.subr.mxu0 0.0
    %119 = vmatpush1.msra.mxu0 0.0
    %120 = vmatprep.subr.mxu0 0.0
    %121 = vmatpush1.msra.mxu0 0.0
    %122 = vmatprep.subr.mxu0 0.0
    %123 = vmatpush1.msra.mxu0 0.0
    %124 = vmatprep.subr.mxu0 0.0
    %125 = vmatpush1.msra.mxu0 0.0
    %126 = vmatprep.subr.mxu0 0.0
    %127 = vmatpush1.msra.mxu0 0.0
    %128 = vmatprep.subr.mxu0 0.0
    %129 = vmatpush1.msra.mxu0 0.0
    %130 = vmatprep.subr.mxu0 0.0
    %131 = vmatpush1.msra.mxu0 0.0
    %132 = vmatprep.subr.mxu0 0.0
    %133 = vmatpush1.msra.mxu0 0.0
    %134 = vmatprep.subr.mxu0 0.0
    %135 = vmatpush1.msra.mxu0 0.0
    %136 = vmatprep.subr.mxu0 0.0
    %137 = vmatpush1.msra.mxu0 0.0
    %138 = vmatprep.subr.mxu0 0.0
    %139 = vmatpush1.msra.mxu0 0.0
    %140 = vmatprep.subr.mxu0 0.0
    %141 = vmatpush1.msra.mxu0 0.0
    %142 = vmatprep.subr.mxu0 0.0
    %143 = vmatpush1.msra.mxu0 0.0
    %144 = vmatprep.subr.mxu0 0.0
    %145 = vmatpush1.msra.mxu0 0.0
    %146 = vmatprep.subr.mxu0 0.0
    %147 = vmatpush1.msra.mxu0 0.0
    %148 = vmatprep.subr.mxu0 0.0
    %149 = vmatpush1.msra.mxu0 0.0
    %150 = vmatprep.subr.mxu0 0.0
    %151 = vmatpush1.msra.mxu0 0.0
    %152 = vmatprep.subr.mxu0 0.0
    %153 = vmatpush1.msra.mxu0 0.0
    %154 = vmatprep.subr.mxu0 0.0
    %155 = vmatpush1.msra.mxu0 0.0
    %156 = vmatprep.mubr.f32.mxu0 0.0
    %157 = vmatmul.mubr.f32.gmra.mrb[0].mxu0 %v65
    %v158 = vpop.f32.mrb[0].mxu0
    %v159 = vadd.f32 %v61, %v158
    %v160 = vpop.f32.mrb[0].mxu0
    %161 = vmatprep.mubr.f32.mxu0 0.0
    %162 = vmatmul.mubr.f32.gmra.mrb[0].mxu0 %v68
    %v163 = vpop.f32.mrb[0].mxu0
    %v164 = vadd.f32 %v61, %v163
    %v165 = vpop.f32.mrb[0].mxu0
    %166 = vmatprep.mubr.f32.mxu0 0.0
    %167 = vmatmul.mubr.f32.gmra.mrb[0].mxu0 %v71
    %v168 = vpop.f32.mrb[0].mxu0
    %v169 = vadd.f32 %v61, %v168
    %v170 = vpop.f32.mrb[0].mxu0
    %171 = vmatprep.mubr.f32.mxu0 0.0
    %172 = vmatmul.mubr.f32.gmra.mrb[0].mxu0 %v74
    %v173 = vpop.f32.mrb[0].mxu0
    %v174 = vadd.f32 %v61, %v173
    %v175 = vpop.f32.mrb[0].mxu0
    %176 = vmatprep.mubr.f32.mxu0 0.0
    %177 = vmatmul.mubr.f32.gmra.mrb[0].mxu0 %v77
    %v178 = vpop.f32.mrb[0].mxu0
    %v179 = vadd.f32 %v61, %v178
    %v180 = vpop.f32.mrb[0].mxu0
    %181 = vmatprep.mubr.f32.mxu0 0.0
    %182 = vmatmul.mubr.f32.gmra.mrb[0].mxu0 %v80
    %v183 = vpop.f32.mrb[0].mxu0
    %v184 = vadd.f32 %v61, %v183
    %v185 = vpop.f32.mrb[0].mxu0
    %186 = vmatprep.mubr.f32.mxu0 0.0
    %187 = vmatmul.mubr.f32.gmra.mrb[0].mxu0 %v83
    %v188 = vpop.f32.mrb[0].mxu0
    %v189 = vadd.f32 %v61, %v188
    %v190 = vpop.f32.mrb[0].mxu0
    %191 = vmatprep.mubr.f32.mxu0 0.0
    %192 = vmatmul.mubr.f32.gmra.mrb[0].mxu0 %v86
    %v193 = vpop.f32.mrb[0].mxu0
    %v194 = vadd.f32 %v61, %v193
    %v195 = vpop.f32.mrb[0].mxu0
    %196 = vdwg.mxu0
    %v197 = vld [vmem:[#allocation3] sm:$0xff]
    %v198 = vld [vmem:[#allocation3 + $0x8] sm:$0xff]
    %v199 = vld [vmem:[#allocation3 + $0x10] sm:$0xff]
    %v200 = vld [vmem:[#allocation3 + $0x18] sm:$0xff]
    %v201 = vld [vmem:[#allocation3 + $0x20] sm:$0xff]
    %v202 = vld [vmem:[#allocation3 + $0x28] sm:$0xff]
    %v203 = vld [vmem:[#allocation3 + $0x30] sm:$0xff]
    %v204 = vld [vmem:[#allocation3 + $0x38] sm:$0xff]
    %v205 = vld [vmem:[#allocation3 + $0x40] sm:$0xff]
    %v206 = vld [vmem:[#allocation3 + $0x48] sm:$0xff]
    %v207 = vld [vmem:[#allocation3 + $0x50] sm:$0xff]
    %v208 = vld [vmem:[#allocation3 + $0x58] sm:$0xff]
    %v209 = vld [vmem:[#allocation3 + $0x60] sm:$0xff]
    %v210 = vld [vmem:[#allocation3 + $0x68] sm:$0xff]
    %v211 = vld [vmem:[#allocation3 + $0x70] sm:$0xff]
    %v212 = vld [vmem:[#allocation3 + $0x78] sm:$0xff]
    %v213 = vpack.c.bf16 %v198, %v197
    %v214 = vpack.c.bf16 %v200, %v199
    %v215 = vpack.c.bf16 %v202, %v201
    %v216 = vpack.c.bf16 %v204, %v203
    %v217 = vpack.c.bf16 %v206, %v205
    %v218 = vpack.c.bf16 %v208, %v207
    %v219 = vpack.c.bf16 %v210, %v209
    %v220 = vpack.c.bf16 %v212, %v211
    %v221 = vtanh.pop %v159
    %v222 = vmul.f32 %v221, 0.5
    %v223 = vpack.c.bf16 %v222, %v222
    %224 = vmatprep.subr.bf16.mxu0 0
    %225 = vmatpush1.bf16.msra.mxu0 %v213
    %226 = vmatprep.subr.bf16.mxu0 0
    %227 = vmatpush1.bf16.msra.mxu0 %v214
    %228 = vmatprep.subr.bf16.mxu0 0
    %229 = vmatpush1.bf16.msra.mxu0 %v215
    %230 = vmatprep.subr.bf16.mxu0 0
    %231 = vmatpush1.bf16.msra.mxu0 %v216
    %232 = vmatprep.subr.bf16.mxu0 0
    %233 = vmatpush1.bf16.msra.mxu0 %v217
    %234 = vmatprep.subr.bf16.mxu0 0
    %235 = vmatpush1.bf16.msra.mxu0 %v218
    %236 = vmatprep.subr.bf16.mxu0 0
    %237 = vmatpush1.bf16.msra.mxu0 %v219
    %238 = vmatprep.subr.bf16.mxu0 0
    %239 = vmatpush1.bf16.msra.mxu0 %v220
    %240 = vmatprep.subr.bf16.mxu0 0
    %241 = vmatpush1.bf16.msra.mxu0 0
    %242 = vmatprep.subr.bf16.mxu0 0
    %243 = vmatpush1.bf16.msra.mxu0 0
    %244 = vmatprep.subr.bf16.mxu0 0
    %245 = vmatpush1.bf16.msra.mxu0 0
    %246 = vmatprep.subr.bf16.mxu0 0
    %247 = vmatpush1.bf16.msra.mxu0 0
    %248 = vmatprep.subr.bf16.mxu0 0
    %249 = vmatpush1.bf16.msra.mxu0 0
    %250 = vmatprep.subr.bf16.mxu0 0
    %251 = vmatpush1.bf16.msra.mxu0 0
    %252 = vmatprep.subr.bf16.mxu0 0
    %253 = vmatpush1.bf16.msra.mxu0 0
    %254 = vmatprep.subr.bf16.mxu0 0
    %255 = vmatpush1.bf16.msra.mxu0 0
    %256 = vmatprep.mubr.bf16.mxu0 0
    %257 = vmatmul.mubr.bf16.gmra.mrb[0].mxu0 %v223
    %v258 = vpop.f32.mrb[0].mxu0
    %v259 = vadd.f32 0.0, %v258
    %v260 = vpop.f32.mrb[0].mxu0
    %v261 = vpop.f32.mrb[0].mxu0
    %v262 = vpop.f32.mrb[0].mxu0
    %263 = vdwg.mxu0
    %v264 = vadd.f32 %v164, %v259
    %v265 = vtanh.pop %v264
    %v266 = vmul.f32 %v265, 0.6666667
    %v267 = vpack.c.bf16 %v266, %v266
    %268 = vmatprep.subr.bf16.mxu0 0
    %269 = vmatpush1.bf16.msra.mxu0 %v213
    %270 = vmatprep.subr.bf16.mxu0 0
    %271 = vmatpush1.bf16.msra.mxu0 %v214
    %272 = vmatprep.subr.bf16.mxu0 0
    %273 = vmatpush1.bf16.msra.mxu0 %v215
    %274 = vmatprep.subr.bf16.mxu0 0
    %275 = vmatpush1.bf16.msra.mxu0 %v216
    %276 = vmatprep.subr.bf16.mxu0 0
    %277 = vmatpush1.bf16.msra.mxu0 %v217
    %278 = vmatprep.subr.bf16.mxu0 0
    %279 = vmatpush1.bf16.msra.mxu0 %v218
    %280 = vmatprep.subr.bf16.mxu0 0
    %281 = vmatpush1.bf16.msra.mxu0 %v219
    %282 = vmatprep.subr.bf16.mxu0 0
    %283 = vmatpush1.bf16.msra.mxu0 %v220
    %284 = vmatprep.subr.bf16.mxu0 0
    %285 = vmatpush1.bf16.msra.mxu0 0
    %286 = vmatprep.subr.bf16.mxu0 0
    %287 = vmatpush1.bf16.msra.mxu0 0
    %288 = vmatprep.subr.bf16.mxu0 0
    %289 = vmatpush1.bf16.msra.mxu0 0
    %290 = vmatprep.subr.bf16.mxu0 0
    %291 = vmatpush1.bf16.msra.mxu0 0
    %292 = vmatprep.subr.bf16.mxu0 0
    %293 = vmatpush1.bf16.msra.mxu0 0
    %294 = vmatprep.subr.bf16.mxu0 0
    %295 = vmatpush1.bf16.msra.mxu0 0
    %296 = vmatprep.subr.bf16.mxu0 0
    %297 = vmatpush1.bf16.msra.mxu0 0
    %298 = vmatprep.subr.bf16.mxu0 0
    %299 = vmatpush1.bf16.msra.mxu0 0
    %300 = vmatprep.mubr.bf16.mxu0 0
    %301 = vmatmul.mubr.bf16.gmra.mrb[0].mxu0 %v267
    %v302 = vpop.f32.mrb[0].mxu0
    %v303 = vadd.f32 0.0, %v302
    %v304 = vpop.f32.mrb[0].mxu0
    %v305 = vpop.f32.mrb[0].mxu0
    %v306 = vpop.f32.mrb[0].mxu0
    %307 = vdwg.mxu0
    %v308 = vadd.f32 %v169, %v303
    %v309 = vtanh.pop %v308
    %v310 = vmul.f32 %v309, 0.75
    %v311 = vpack.c.bf16 %v310, %v310
    %312 = vmatprep.subr.bf16.mxu0 0
    %313 = vmatpush1.bf16.msra.mxu0 %v213
    %314 = vmatprep.subr.bf16.mxu0 0
    %315 = vmatpush1.bf16.msra.mxu0 %v214
    %316 = vmatprep.subr.bf16.mxu0 0
    %317 = vmatpush1.bf16.msra.mxu0 %v215
    %318 = vmatprep.subr.bf16.mxu0 0
    %319 = vmatpush1.bf16.msra.mxu0 %v216
    %320 = vmatprep.subr.bf16.mxu0 0
    %321 = vmatpush1.bf16.msra.mxu0 %v217
    %322 = vmatprep.subr.bf16.mxu0 0
    %323 = vmatpush1.bf16.msra.mxu0 %v218
    %324 = vmatprep.subr.bf16.mxu0 0
    %325 = vmatpush1.bf16.msra.mxu0 %v219
    %326 = vmatprep.subr.bf16.mxu0 0
    %327 = vmatpush1.bf16.msra.mxu0 %v220
    %328 = vmatprep.subr.bf16.mxu0 0
    %329 = vmatpush1.bf16.msra.mxu0 0
    %330 = vmatprep.subr.bf16.mxu0 0
    %331 = vmatpush1.bf16.msra.mxu0 0
    %332 = vmatprep.subr.bf16.mxu0 0
    %333 = vmatpush1.bf16.msra.mxu0 0
    %334 = vmatprep.subr.bf16.mxu0 0
    %335 = vmatpush1.bf16.msra.mxu0 0
    %336 = vmatprep.subr.bf16.mxu0 0
    %337 = vmatpush1.bf16.msra.mxu0 0
    %338 = vmatprep.subr.bf16.mxu0 0
    %339 = vmatpush1.bf16.msra.mxu0 0
    %340 = vmatprep.subr.bf16.mxu0 0
    %341 = vmatpush1.bf16.msra.mxu0 0
    %342 = vmatprep.subr.bf16.mxu0 0
    %343 = vmatpush1.bf16.msra.mxu0 0
    %344 = vmatprep.mubr.bf16.mxu0 0
    %345 = vmatmul.mubr.bf16.gmra.mrb[0].mxu0 %v311
    %v346 = vpop.f32.mrb[0].mxu0
    %v347 = vadd.f32 0.0, %v346
    %v348 = vpop.f32.mrb[0].mxu0
    %v349 = vpop.f32.mrb[0].mxu0
    %v350 = vpop.f32.mrb[0].mxu0
    %351 = vdwg.mxu0
    %v352 = vadd.f32 %v174, %v347
    %v353 = vtanh.pop %v352
    %v354 = vmul.f32 %v353, 0.8
    %v355 = vpack.c.bf16 %v354, %v354
    %356 = vmatprep.subr.bf16.mxu0 0
    %357 = vmatpush1.bf16.msra.mxu0 %v213
    %358 = vmatprep.subr.bf16.mxu0 0
    %359 = vmatpush1.bf16.msra.mxu0 %v214
    %360 = vmatprep.subr.bf16.mxu0 0
    %361 = vmatpush1.bf16.msra.mxu0 %v215
    %362 = vmatprep.subr.bf16.mxu0 0
    %363 = vmatpush1.bf16.msra.mxu0 %v216
    %364 = vmatprep.subr.bf16.mxu0 0
    %365 = vmatpush1.bf16.msra.mxu0 %v217
    %366 = vmatprep.subr.bf16.mxu0 0
    %367 = vmatpush1.bf16.msra.mxu0 %v218
    %368 = vmatprep.subr.bf16.mxu0 0
    %369 = vmatpush1.bf16.msra.mxu0 %v219
    %370 = vmatprep.subr.bf16.mxu0 0
    %371 = vmatpush1.bf16.msra.mxu0 %v220
    %372 = vmatprep.subr.bf16.mxu0 0
    %373 = vmatpush1.bf16.msra.mxu0 0
    %374 = vmatprep.subr.bf16.mxu0 0
    %375 = vmatpush1.bf16.msra.mxu0 0
    %376 = vmatprep.subr.bf16.mxu0 0
    %377 = vmatpush1.bf16.msra.mxu0 0
    %378 = vmatprep.subr.bf16.mxu0 0
    %379 = vmatpush1.bf16.msra.mxu0 0
    %380 = vmatprep.subr.bf16.mxu0 0
    %381 = vmatpush1.bf16.msra.mxu0 0
    %382 = vmatprep.subr.bf16.mxu0 0
    %383 = vmatpush1.bf16.msra.mxu0 0
    %384 = vmatprep.subr.bf16.mxu0 0
    %385 = vmatpush1.bf16.msra.mxu0 0
    %386 = vmatprep.subr.bf16.mxu0 0
    %387 = vmatpush1.bf16.msra.mxu0 0
    %388 = vmatprep.mubr.bf16.mxu0 0
    %389 = vmatmul.mubr.bf16.gmra.mrb[0].mxu0 %v355
    %v390 = vpop.f32.mrb[0].mxu0
    %v391 = vadd.f32 0.0, %v390
    %v392 = vpop.f32.mrb[0].mxu0
    %v393 = vpop.f32.mrb[0].mxu0
    %v394 = vpop.f32.mrb[0].mxu0
    %395 = vdwg.mxu0
    %v396 = vadd.f32 %v179, %v391
    %v397 = vtanh.pop %v396
    %v398 = vmul.f32 %v397, 0.8333333
    %v399 = vpack.c.bf16 %v398, %v398
    %400 = vmatprep.subr.bf16.mxu0 0
    %401 = vmatpush1.bf16.msra.mxu0 %v213
    %402 = vmatprep.subr.bf16.mxu0 0
    %403 = vmatpush1.bf16.msra.mxu0 %v214
    %404 = vmatprep.subr.bf16.mxu0 0
    %405 = vmatpush1.bf16.msra.mxu0 %v215
    %406 = vmatprep.subr.bf16.mxu0 0
    %407 = vmatpush1.bf16.msra.mxu0 %v216
    %408 = vmatprep.subr.bf16.mxu0 0
    %409 = vmatpush1.bf16.msra.mxu0 %v217
    %410 = vmatprep.subr.bf16.mxu0 0
    %411 = vmatpush1.bf16.msra.mxu0 %v218
    %412 = vmatprep.subr.bf16.mxu0 0
    %413 = vmatpush1.bf16.msra.mxu0 %v219
    %414 = vmatprep.subr.bf16.mxu0 0
    %415 = vmatpush1.bf16.msra.mxu0 %v220
    %416 = vmatprep.subr.bf16.mxu0 0
    %417 = vmatpush1.bf16.msra.mxu0 0
    %418 = vmatprep.subr.bf16.mxu0 0
    %419 = vmatpush1.bf16.msra.mxu0 0
    %420 = vmatprep.subr.bf16.mxu0 0
    %421 = vmatpush1.bf16.msra.mxu0 0
    %422 = vmatprep.subr.bf16.mxu0 0
    %423 = vmatpush1.bf16.msra.mxu0 0
    %424 = vmatprep.subr.bf16.mxu0 0
    %425 = vmatpush1.bf16.msra.mxu0 0
    %426 = vmatprep.subr.bf16.mxu0 0
    %427 = vmatpush1.bf16.msra.mxu0 0
    %428 = vmatprep.subr.bf16.mxu0 0
    %429 = vmatpush1.bf16.msra.mxu0 0
    %430 = vmatprep.subr.bf16.mxu0 0
    %431 = vmatpush1.bf16.msra.mxu0 0
    %432 = vmatprep.mubr.bf16.mxu0 0
    %433 = vmatmul.mubr.bf16.gmra.mrb[0].mxu0 %v399
    %v434 = vpop.f32.mrb[0].mxu0
    %v435 = vadd.f32 0.0, %v434
    %v436 = vpop.f32.mrb[0].mxu0
    %v437 = vpop.f32.mrb[0].mxu0
    %v438 = vpop.f32.mrb[0].mxu0
    %439 = vdwg.mxu0
    %v440 = vadd.f32 %v184, %v435
    %v441 = vtanh.pop %v440
    %v442 = vmul.f32 %v441, 0.85714287
    %v443 = vpack.c.bf16 %v442, %v442
    %444 = vmatprep.subr.bf16.mxu0 0
    %445 = vmatpush1.bf16.msra.mxu0 %v213
    %446 = vmatprep.subr.bf16.mxu0 0
    %447 = vmatpush1.bf16.msra.mxu0 %v214
    %448 = vmatprep.subr.bf16.mxu0 0
    %449 = vmatpush1.bf16.msra.mxu0 %v215
    %450 = vmatprep.subr.bf16.mxu0 0
    %451 = vmatpush1.bf16.msra.mxu0 %v216
    %452 = vmatprep.subr.bf16.mxu0 0
    %453 = vmatpush1.bf16.msra.mxu0 %v217
    %454 = vmatprep.subr.bf16.mxu0 0
    %455 = vmatpush1.bf16.msra.mxu0 %v218
    %456 = vmatprep.subr.bf16.mxu0 0
    %457 = vmatpush1.bf16.msra.mxu0 %v219
    %458 = vmatprep.subr.bf16.mxu0 0
    %459 = vmatpush1.bf16.msra.mxu0 %v220
    %460 = vmatprep.subr.bf16.mxu0 0
    %461 = vmatpush1.bf16.msra.mxu0 0
    %462 = vmatprep.subr.bf16.mxu0 0
    %463 = vmatpush1.bf16.msra.mxu0 0
    %464 = vmatprep.subr.bf16.mxu0 0
    %465 = vmatpush1.bf16.msra.mxu0 0
    %466 = vmatprep.subr.bf16.mxu0 0
    %467 = vmatpush1.bf16.msra.mxu0 0
    %468 = vmatprep.subr.bf16.mxu0 0
    %469 = vmatpush1.bf16.msra.mxu0 0
    %470 = vmatprep.subr.bf16.mxu0 0
    %471 = vmatpush1.bf16.msra.mxu0 0
    %472 = vmatprep.subr.bf16.mxu0 0
    %473 = vmatpush1.bf16.msra.mxu0 0
    %474 = vmatprep.subr.bf16.mxu0 0
    %475 = vmatpush1.bf16.msra.mxu0 0
    %476 = vmatprep.mubr.bf16.mxu0 0
    %477 = vmatmul.mubr.bf16.gmra.mrb[0].mxu0 %v443
    %v478 = vpop.f32.mrb[0].mxu0
    %v479 = vadd.f32 0.0, %v478
    %v480 = vpop.f32.mrb[0].mxu0
    %v481 = vpop.f32.mrb[0].mxu0
    %v482 = vpop.f32.mrb[0].mxu0
    %483 = vdwg.mxu0
    %v484 = vadd.f32 %v189, %v479
    %v485 = vtanh.pop %v484
    %v486 = vmul.f32 %v485, 0.875
    %v487 = vpack.c.bf16 %v486, %v486
    %488 = vmatprep.subr.bf16.mxu0 0
    %489 = vmatpush1.bf16.msra.mxu0 %v213
    %490 = vmatprep.subr.bf16.mxu0 0
    %491 = vmatpush1.bf16.msra.mxu0 %v214
    %492 = vmatprep.subr.bf16.mxu0 0
    %493 = vmatpush1.bf16.msra.mxu0 %v215
    %494 = vmatprep.subr.bf16.mxu0 0
    %495 = vmatpush1.bf16.msra.mxu0 %v216
    %496 = vmatprep.subr.bf16.mxu0 0
    %497 = vmatpush1.bf16.msra.mxu0 %v217
    %498 = vmatprep.subr.bf16.mxu0 0
    %499 = vmatpush1.bf16.msra.mxu0 %v218
    %500 = vmatprep.subr.bf16.mxu0 0
    %501 = vmatpush1.bf16.msra.mxu0 %v219
    %502 = vmatprep.subr.bf16.mxu0 0
    %503 = vmatpush1.bf16.msra.mxu0 %v220
    %504 = vmatprep.subr.bf16.mxu0 0
    %505 = vmatpush1.bf16.msra.mxu0 0
    %506 = vmatprep.subr.bf16.mxu0 0
    %507 = vmatpush1.bf16.msra.mxu0 0
    %508 = vmatprep.subr.bf16.mxu0 0
    %509 = vmatpush1.bf16.msra.mxu0 0
    %510 = vmatprep.subr.bf16.mxu0 0
    %511 = vmatpush1.bf16.msra.mxu0 0
    %512 = vmatprep.subr.bf16.mxu0 0
    %513 = vmatpush1.bf16.msra.mxu0 0
    %514 = vmatprep.subr.bf16.mxu0 0
    %515 = vmatpush1.bf16.msra.mxu0 0
    %516 = vmatprep.subr.bf16.mxu0 0
    %517 = vmatpush1.bf16.msra.mxu0 0
    %518 = vmatprep.subr.bf16.mxu0 0
    %519 = vmatpush1.bf16.msra.mxu0 0
    %520 = vmatprep.mubr.bf16.mxu0 0
    %521 = vmatmul.mubr.bf16.gmra.mrb[0].mxu0 %v487
    %v522 = vpop.f32.mrb[0].mxu0
    %v523 = vadd.f32 0.0, %v522
    %v524 = vpop.f32.mrb[0].mxu0
    %v525 = vpop.f32.mrb[0].mxu0
    %v526 = vpop.f32.mrb[0].mxu0
    %527 = vdwg.mxu0
    %v528 = vadd.f32 %v194, %v523
    %v529 = vtanh.pop %v528
    %v530 = vld [vmem:[%s4] sm:$0x1]
    %v532 = vlaneseq
    %v533 = vshrl.u32 %v532, 7
    %v534 = vsub.s32 0, %v533
    %v535 = vrot.slane %v530, %v534
    %v537 = vmul.f32 %v529, %v535
    %538 = vadd.xlane.f32.xlu0 %v537
    %v539 = vpop.xlane.xlu0 %538
    %v540 = vld [vmem:[#allocation2] sm:$0x1]
    %v542 = vlaneseq
    %v543 = vshrl.u32 %v542, 7
    %v544 = vsub.s32 0, %v543
    %v545 = vrot.slane %v540, %v544
    %v547 = vadd.f32 %v539, %v545
    %549 = vset.pattern.permute.xlu0 0
    %550 = vperm.xlu0 %549, %v547
    %v551 = vpop.permute.xlu0 %550
    %553 = vst [vmem:[#allocation7] sm:$0xff] %v551
    %v554 = vld [vmem:[%s6] sm:$0xff]
    %v555 = vsub.f32 %v547, %v554
    %v556 = vmul.f32 %v555, %v555
    %vm557 = vcmask 7168
    %v558 = vsel %vm557, %v556, 0.0
    %559 = vadd.xlane.f32.xlu0 %v558
    %v560 = vpop.xlane.xlu0 %559
    %v561 = vrot.slane %v560, 4
    %v562 = vadd.f32 %v560, %v561
    %v563 = vrot.slane %v562, 2
    %v564 = vadd.f32 %v562, %v563
    %v565 = vrot.slane %v564, 1
    %v566 = vadd.f32 %v564, %v565
    %s567 = vtos %v566
    %v568 = vrcp.pop 8.0
    %s569 = vtos %v568
    %s570 = smul.f32 %s567, %s569
    %s571 = scalar_lea.smem [#allocation8], 0
    %572 = sst [smem:[%s571]] %s570
    // Predicated region
    $region34: #{tpu_custom_call.1} parent=1 // pred_check
      _
    $region35: #{tpu_custom_call.1} parent=1 // pred_check_branch
      %574 = sbr.rel (0) target = $region37
    $region36: #{tpu_custom_call.1} parent=1 // pred_region
      %s576 = ssub.s32 128, 128
      %577 = vsyncadd [#allocation5], %s576
      %s579 = sshll.u32 [#allocation7], 4
      %s580 = int_to_ptr.vmem [resolvable:$true] %s579
      %582 = dma.vmem_to_hbm [thread:$0]  %s580, 128, %s7, [#allocation5]
    $region37: #{tpu_custom_call.1} parent=1 // pred_fallthru
      _
    // Predicated region
    $region38: #{tpu_custom_call.1} parent=1 // pred_check
      _
    $region39: #{tpu_custom_call.1} parent=1 // pred_check_branch
      %584 = sbr.rel (0) target = $region41
    $region40: #{tpu_custom_call.1} parent=1 // pred_region
      %s586 = ssub.s32 16, 16
      %587 = vsyncadd [#allocation6], %s586
      %590 = dma.smem_to_hbm [#allocation8], 16, %s8, [#allocation6]
    $region41: #{tpu_custom_call.1} parent=1 // pred_fallthru
      _
    // Predicated region
    $region42: #{tpu_custom_call.1} parent=1 // pred_check
      _
    $region43: #{tpu_custom_call.1} parent=1 // pred_check_branch
      %592 = sbr.rel (0) target = $region45
    $region44: #{tpu_custom_call.1} parent=1 // pred_region
      %593 = dma.done [#allocation5], 128
    $region45: #{tpu_custom_call.1} parent=1 // pred_fallthru
      _
    // Predicated region
    $region46: #{tpu_custom_call.1} parent=1 // pred_check
      _
    $region47: #{tpu_custom_call.1} parent=1 // pred_check_branch
      %595 = sbr.rel (0) target = $region49
    $region48: #{tpu_custom_call.1} parent=1 // pred_region
      %596 = dma.done [#allocation6], 16
    $region49: #{tpu_custom_call.1} parent=1 // pred_fallthru
      _
    %597 = sfence
    %598 = vsyncpa [#allocation4], 1
    %599 = vsyncpa [#allocation5], 1
    %600 = vsyncpa [#allocation6], 1

</llo_original>
